<compile_context>
chip_gen: v5e
topology: v5e:2x2
jax: 0.10.0
libtpu: 0.0.40
codegen_flags: <defaults>
</compile_context>

<pallas_src>
import functools
import math

import jax
import jax.numpy as jnp
from jax.experimental import pallas as pl
from jax.experimental.pallas import tpu as pltpu


def _round_up(n, m):
    return ((n + m - 1) // m) * m


# ----------------------------- kernel ---------------------------------------


def _model_kernel(x_ref,
                  w1_ref, b1_ref,
                  w2_ref, b2_ref,
                  w3_ref, b3_ref,
                  wc_ref, bc_ref,
                  logits_ref, scores_ref,
                  *, num_classes):
    x = x_ref[...]  # (TILE_B, Fp) bf16

    # --- ClusterMap: Linear -> ReLU -> Linear -> ReLU -> Linear ---
    h = jnp.dot(x, w1_ref[...], preferred_element_type=jnp.float32) + b1_ref[...]
    h = jnp.maximum(h, 0.0)
    h = jnp.dot(h.astype(jnp.bfloat16), w2_ref[...],
                preferred_element_type=jnp.float32) + b2_ref[...]
    h = jnp.maximum(h, 0.0)
    h = jnp.dot(h.astype(jnp.bfloat16), w3_ref[...],
                preferred_element_type=jnp.float32) + b3_ref[...]

    # --- ClassificationHead: Linear -> logits (class dim lane-padded to 128) ---
    logits = jnp.dot(h.astype(jnp.bfloat16), wc_ref[...],
                     preferred_element_type=jnp.float32) + bc_ref[...]
    logits_ref[...] = logits  # padded class lanes are 0; wrapper slices them off

    # numerically-stable softmax restricted to the valid class lanes
    col = jax.lax.broadcasted_iota(jnp.int32, logits.shape, 1)
    valid = col < num_classes
    m = jnp.max(jnp.where(valid, logits, -jnp.inf), axis=-1, keepdims=True)
    e = jnp.where(valid, jnp.exp(logits - m), 0.0)
    denom = jnp.sum(e, axis=-1, keepdims=True)
    scores_ref[...] = e / denom  # exact division: rows sum to 1 (f32 precision)


# --------------------------- host wrappers -----------------------------------


def prepare_params(params, input_size, num_classes):
    """One-time prep: transpose to (in, out), pad (F->16-mult, C->128-mult), cast bf16."""
    (w1, b1), (w2, b2), (w3, b3), (wc, bc) = params
    f_pad = _round_up(max(input_size, 1), 16)    # sublane-friendly, NOT 128
    c_pad = _round_up(max(num_classes, 1), 128)  # lane-dense outputs

    def pad_w(w, rows, cols):  # torch layout (out, in) -> padded (in, out) bf16
        wt = w.T.astype(jnp.float32)
        wt = jnp.pad(wt, ((0, rows - wt.shape[0]), (0, cols - wt.shape[1])))
        return wt.astype(jnp.bfloat16)

    def pad_b(b, cols):  # (out,) -> padded (1, out) f32
        b2d = b.astype(jnp.float32)[None, :]
        return jnp.pad(b2d, ((0, 0), (0, cols - b2d.shape[1])))

    return {
        "w1": pad_w(w1, f_pad, f_pad), "b1": pad_b(b1, f_pad),
        "w2": pad_w(w2, f_pad, f_pad), "b2": pad_b(b2, f_pad),
        "w3": pad_w(w3, f_pad, f_pad), "b3": pad_b(b3, f_pad),
        "wc": pad_w(wc, f_pad, c_pad), "bc": pad_b(bc, c_pad),
        "input_size": input_size, "num_classes": num_classes,
        "f_pad": f_pad, "c_pad": c_pad,
    }


def classification_model_forward(x, prepped):
    """Inference path (y=None): returns (logits, scores, preds, max_scores)."""
    B = x.shape[0]
    F = prepped["input_size"]
    C = prepped["num_classes"]
    Fp = prepped["f_pad"]
    Cp = prepped["c_pad"]

    # ---- batch tiling: multiple of 16 (bf16 sublane tile), up to 1024 rows,
    # ---- and >=2 grid steps whenever the batch allows it (v7x megacore).
    MAX_TILE_B = 1024
    b16 = _round_up(B, 16)
    tile_b = min(MAX_TILE_B, max(16, _round_up(-(-b16 // 2), 16)))
    Bp = _round_up(B, tile_b)
    num_tiles = Bp // tile_b

    xp = jnp.pad(x.astype(jnp.float32),
                 ((0, Bp - B), (0, Fp - F))).astype(jnp.bfloat16)

    kernel = functools.partial(_model_kernel, num_classes=C)

    # ---- VMEM budget from the actual footprint (+headroom), not a blanket 48 MiB
    w_bytes = 2 * (3 * Fp * Fp + Fp * Cp)        # bf16 weights (resident)
    b_bytes = 4 * (3 * Fp + Cp)                  # f32 biases (resident)
    x_tile_bytes = 2 * tile_b * Fp               # bf16 input tile
    out_tile_bytes = 2 * (4 * tile_b * Cp)       # two f32 output tiles
    vmem_limit = int(min(100 * 1024 * 1024,
                         max(8 * 1024 * 1024,
                             2 * (w_bytes + b_bytes + x_tile_bytes + out_tile_bytes)
                             + 4 * 1024 * 1024)))

    flops = 2 * Bp * (3 * Fp * Fp + Fp * Cp)
    bytes_accessed = (Bp * Fp * 2          # x (bf16)
                      + w_bytes + b_bytes  # params
                      + 2 * Bp * Cp * 4)   # logits + scores (f32)
    cost = pl.CostEstimate(flops=flops, transcendentals=Bp * Cp,
                           bytes_accessed=bytes_accessed)

    grid_spec = pltpu.PrefetchScalarGridSpec(
        num_scalar_prefetch=0,
        grid=(num_tiles,),
        in_specs=[
            pl.BlockSpec((tile_b, Fp), lambda i: (i, 0)),   # x tile
            pl.BlockSpec((Fp, Fp), lambda i: (0, 0)),       # w1 (VMEM-resident)
            pl.BlockSpec((1, Fp), lambda i: (0, 0)),        # b1
            pl.BlockSpec((Fp, Fp), lambda i: (0, 0)),       # w2
            pl.BlockSpec((1, Fp), lambda i: (0, 0)),        # b2
            pl.BlockSpec((Fp, Fp), lambda i: (0, 0)),       # w3
            pl.BlockSpec((1, Fp), lambda i: (0, 0)),        # b3
            pl.BlockSpec((Fp, Cp), lambda i: (0, 0)),       # wc
            pl.BlockSpec((1, Cp), lambda i: (0, 0)),        # bc
        ],
        out_specs=(
            pl.BlockSpec((tile_b, Cp), lambda i: (i, 0)),   # logits (lane-dense)
            pl.BlockSpec((tile_b, Cp), lambda i: (i, 0)),   # scores (lane-dense)
        ),
    )

    logits_p, scores_p = pl.pallas_call(
        kernel,
        out_shape=(jax.ShapeDtypeStruct((Bp, Cp), jnp.float32),
                   jax.ShapeDtypeStruct((Bp, Cp), jnp.float32)),
        grid_spec=grid_spec,
        compiler_params=pltpu.CompilerParams(
            dimension_semantics=("parallel",),
            vmem_limit_bytes=vmem_limit),
        cost_estimate=cost,
    )(xp,
      prepped["w1"], prepped["b1"],
      prepped["w2"], prepped["b2"],
      prepped["w3"], prepped["b3"],
      prepped["wc"], prepped["bc"])

    # slice padding away; tiny (B,)-shaped results are trivial XLA ops
    logits = logits_p[:B, :C]
    scores = scores_p[:B, :C]
    preds = jnp.argmax(logits, axis=-1)  # int32 (torch argmax returns int64)
    max_scores = jnp.take_along_axis(scores, preds[:, None], axis=-1)[:, 0]
    return logits, scores, preds, max_scores


# --------------------------- param init / demo --------------------------------


def _init_linear(key, in_features, out_features):
    """Deterministic PyTorch-style init: U(-1/sqrt(fan_in), 1/sqrt(fan_in))."""
    kw, kb = jax.random.split(key)
    bound = 1.0 / math.sqrt(in_features)
    w = jax.random.uniform(kw, (out_features, in_features), jnp.float32,
                           minval=-bound, maxval=bound)
    b = jax.random.uniform(kb, (out_features,), jnp.float32,
                           minval=-bound, maxval=bound)
    return w, b


def init_params(key, input_size, num_classes):
    keys = jax.random.split(key, 4)
    # ClusterMap: layer_sizes = [input_size, input_size, input_size]
    p1 = _init_linear(keys[0], input_size, input_size)
    p2 = _init_linear(keys[1], input_size, input_size)
    p3 = _init_linear(keys[2], input_size, input_size)
    # ClassificationHead
    pc = _init_linear(keys[3], input_size, num_classes)
    return (p1, p2, p3, pc)


if __name__ == "__main__":
    key = jax.random.PRNGKey(0)
    k_x, k_p = jax.random.split(key)

    batch = 8
    input_size = 32
    num_classes = 8

    x = jax.random.normal(k_x, (batch, input_size), dtype=jnp.float32)
    params = init_params(k_p, input_size, num_classes)
    prepped = prepare_params(params, input_size, num_classes)

    logits, scores, preds, max_scores = classification_model_forward(x, prepped)
    jax.block_until_ready((logits, scores, preds, max_scores))

    assert logits.shape == (batch, num_classes)
    assert scores.shape == (batch, num_classes)
    assert preds.shape == (batch,)
    assert max_scores.shape == (batch,)
    # sanity: softmax rows sum to ~1 and max_scores matches the argmax lane
    assert bool(jnp.all(jnp.abs(jnp.sum(scores, axis=-1) - 1.0) < 1e-3))
    assert bool(jnp.all(jnp.abs(max_scores - jnp.max(scores, axis=-1)) < 1e-6))
    assert bool(jnp.all(jnp.isfinite(logits)))

    print("KERNEL_OK")
</pallas_src>

<mosaic_0001>
module attributes {stable_mosaic.version = 11 : i64} {
  func.func @_model_kernel(%arg0: i32, %arg1: memref<16x32xbf16, #tpu.memory_space<vmem>>, %arg2: memref<32x32xbf16, #tpu.memory_space<vmem>>, %arg3: memref<1x32xf32, #tpu.memory_space<vmem>>, %arg4: memref<32x32xbf16, #tpu.memory_space<vmem>>, %arg5: memref<1x32xf32, #tpu.memory_space<vmem>>, %arg6: memref<32x32xbf16, #tpu.memory_space<vmem>>, %arg7: memref<1x32xf32, #tpu.memory_space<vmem>>, %arg8: memref<32x128xbf16, #tpu.memory_space<vmem>>, %arg9: memref<1x128xf32, #tpu.memory_space<vmem>>, %arg10: memref<16x128xf32, #tpu.memory_space<vmem>>, %arg11: memref<16x128xf32, #tpu.memory_space<vmem>>) attributes {dimension_semantics = [#tpu.dimension_semantics<parallel>], iteration_bounds = array<i64: 1>, scalar_prefetch = 0 : i64, scratch_operands = 0 : i64, tpu.core_type = #tpu.core_type<tc>, window_params = [{transform_indices = @transform_0, window_bounds = array<i64: 16, 32>}, {pipeline_mode = #tpu.pipeline_mode<synchronous>, transform_indices = @transform_1, window_bounds = array<i64: 32, 32>}, {pipeline_mode = #tpu.pipeline_mode<synchronous>, transform_indices = @transform_2, window_bounds = array<i64: 1, 32>}, {pipeline_mode = #tpu.pipeline_mode<synchronous>, transform_indices = @transform_3, window_bounds = array<i64: 32, 32>}, {pipeline_mode = #tpu.pipeline_mode<synchronous>, transform_indices = @transform_4, window_bounds = array<i64: 1, 32>}, {pipeline_mode = #tpu.pipeline_mode<synchronous>, transform_indices = @transform_5, window_bounds = array<i64: 32, 32>}, {pipeline_mode = #tpu.pipeline_mode<synchronous>, transform_indices = @transform_6, window_bounds = array<i64: 1, 32>}, {pipeline_mode = #tpu.pipeline_mode<synchronous>, transform_indices = @transform_7, window_bounds = array<i64: 32, 128>}, {pipeline_mode = #tpu.pipeline_mode<synchronous>, transform_indices = @transform_8, window_bounds = array<i64: 1, 128>}, {transform_indices = @transform_9, window_bounds = array<i64: 16, 128>}, {transform_indices = @transform_10, window_bounds = array<i64: 16, 128>}]} {
    %c0 = arith.constant 0 : index
    %c0_0 = arith.constant 0 : index
    %0 = vector.load %arg1[%c0, %c0_0] : memref<16x32xbf16, #tpu.memory_space<vmem>>, vector<16x32xbf16>
    %c0_1 = arith.constant 0 : index
    %c0_2 = arith.constant 0 : index
    %1 = vector.load %arg2[%c0_1, %c0_2] : memref<32x32xbf16, #tpu.memory_space<vmem>>, vector<32x32xbf16>
    %cst = arith.constant dense<0.000000e+00> : vector<16x32xf32>
    %2 = tpu.matmul %0, %1, %cst {dimension_numbers = #tpu.dot_dimension_numbers<[1], [0], [0], [1], [0, 0, 1, 1], [], []>} : vector<16x32xbf16>, vector<32x32xbf16>, vector<16x32xf32> -> vector<16x32xf32>
    %c0_3 = arith.constant 0 : index
    %c0_4 = arith.constant 0 : index
    %3 = vector.load %arg3[%c0_3, %c0_4] : memref<1x32xf32, #tpu.memory_space<vmem>>, vector<1x32xf32>
    %4 = vector.broadcast %3 : vector<1x32xf32> to vector<16x32xf32>
    %5 = arith.addf %2, %4 : vector<16x32xf32>
    %cst_5 = arith.constant 0.000000e+00 : f32
    %6 = vector.broadcast %cst_5 : f32 to vector<16x32xf32>
    %7 = arith.maximumf %5, %6 : vector<16x32xf32>
    %8 = arith.truncf %7 : vector<16x32xf32> to vector<16x32xbf16>
    %c0_6 = arith.constant 0 : index
    %c0_7 = arith.constant 0 : index
    %9 = vector.load %arg4[%c0_6, %c0_7] : memref<32x32xbf16, #tpu.memory_space<vmem>>, vector<32x32xbf16>
    %cst_8 = arith.constant dense<0.000000e+00> : vector<16x32xf32>
    %10 = tpu.matmul %8, %9, %cst_8 {dimension_numbers = #tpu.dot_dimension_numbers<[1], [0], [0], [1], [0, 0, 1, 1], [], []>} : vector<16x32xbf16>, vector<32x32xbf16>, vector<16x32xf32> -> vector<16x32xf32>
    %c0_9 = arith.constant 0 : index
    %c0_10 = arith.constant 0 : index
    %11 = vector.load %arg5[%c0_9, %c0_10] : memref<1x32xf32, #tpu.memory_space<vmem>>, vector<1x32xf32>
    %12 = vector.broadcast %11 : vector<1x32xf32> to vector<16x32xf32>
    %13 = arith.addf %10, %12 : vector<16x32xf32>
    %cst_11 = arith.constant 0.000000e+00 : f32
    %14 = vector.broadcast %cst_11 : f32 to vector<16x32xf32>
    %15 = arith.maximumf %13, %14 : vector<16x32xf32>
    %16 = arith.truncf %15 : vector<16x32xf32> to vector<16x32xbf16>
    %c0_12 = arith.constant 0 : index
    %c0_13 = arith.constant 0 : index
    %17 = vector.load %arg6[%c0_12, %c0_13] : memref<32x32xbf16, #tpu.memory_space<vmem>>, vector<32x32xbf16>
    %cst_14 = arith.constant dense<0.000000e+00> : vector<16x32xf32>
    %18 = tpu.matmul %16, %17, %cst_14 {dimension_numbers = #tpu.dot_dimension_numbers<[1], [0], [0], [1], [0, 0, 1, 1], [], []>} : vector<16x32xbf16>, vector<32x32xbf16>, vector<16x32xf32> -> vector<16x32xf32>
    %c0_15 = arith.constant 0 : index
    %c0_16 = arith.constant 0 : index
    %19 = vector.load %arg7[%c0_15, %c0_16] : memref<1x32xf32, #tpu.memory_space<vmem>>, vector<1x32xf32>
    %20 = vector.broadcast %19 : vector<1x32xf32> to vector<16x32xf32>
    %21 = arith.addf %18, %20 : vector<16x32xf32>
    %22 = arith.truncf %21 : vector<16x32xf32> to vector<16x32xbf16>
    %c0_17 = arith.constant 0 : index
    %c0_18 = arith.constant 0 : index
    %23 = vector.load %arg8[%c0_17, %c0_18] : memref<32x128xbf16, #tpu.memory_space<vmem>>, vector<32x128xbf16>
    %cst_19 = arith.constant dense<0.000000e+00> : vector<16x128xf32>
    %24 = tpu.matmul %22, %23, %cst_19 {dimension_numbers = #tpu.dot_dimension_numbers<[1], [0], [0], [1], [0, 0, 1, 1], [], []>} : vector<16x32xbf16>, vector<32x128xbf16>, vector<16x128xf32> -> vector<16x128xf32>
    %c0_20 = arith.constant 0 : index
    %c0_21 = arith.constant 0 : index
    %25 = vector.load %arg9[%c0_20, %c0_21] : memref<1x128xf32, #tpu.memory_space<vmem>>, vector<1x128xf32>
    %26 = vector.broadcast %25 : vector<1x128xf32> to vector<16x128xf32>
    %27 = arith.addf %24, %26 : vector<16x128xf32>
    %c0_22 = arith.constant 0 : index
    %c0_23 = arith.constant 0 : index
    %28 = vector.load %arg10[%c0_22, %c0_23] : memref<16x128xf32, #tpu.memory_space<vmem>>, vector<16x128xf32>
    tpu.vector_store %arg10[%c0_22, %c0_23], %27 {strides = array<i32>} : memref<16x128xf32, #tpu.memory_space<vmem>>, vector<16x128xf32>,
    %29 = tpu.iota {dimensions = array<i32: 1>} : vector<16x128xi32>
    %c8_i32 = arith.constant 8 : i32
    %30 = vector.broadcast %c8_i32 : i32 to vector<16x128xi32>
    %31 = arith.cmpi slt, %29, %30 : vector<16x128xi32>
    %cst_24 = arith.constant 0xFF800000 : f32
    %32 = vector.broadcast %cst_24 : f32 to vector<16x128xf32>
    %33 = arith.select %31, %27, %32 : vector<16x128xi1>, vector<16x128xf32>
    %cst_25 = arith.constant dense<0xFF800000> : vector<16xf32>
    %34 = vector.multi_reduction <maximumf>, %33, %cst_25 [1] : vector<16x128xf32> to vector<16xf32>
    %35 = vector.shape_cast %34 : vector<16xf32> to vector<16x1xf32>
    %36 = vector.broadcast %35 : vector<16x1xf32> to vector<16x128xf32>
    %37 = arith.subf %27, %36 : vector<16x128xf32>
    %38 = math.exp %37 : vector<16x128xf32>
    %cst_26 = arith.constant 0.000000e+00 : f32
    %39 = vector.broadcast %cst_26 : f32 to vector<16x128xf32>
    %40 = arith.select %31, %38, %39 : vector<16x128xi1>, vector<16x128xf32>
    %cst_27 = arith.constant dense<0.000000e+00> : vector<16xf32>
    %41 = vector.multi_reduction <add>, %40, %cst_27 [1] : vector<16x128xf32> to vector<16xf32>
    %42 = vector.shape_cast %41 : vector<16xf32> to vector<16x1xf32>
    %43 = vector.broadcast %42 : vector<16x1xf32> to vector<16x128xf32>
    %44 = arith.divf %40, %43 : vector<16x128xf32>
    %c0_28 = arith.constant 0 : index
    %c0_29 = arith.constant 0 : index
    %45 = vector.load %arg11[%c0_28, %c0_29] : memref<16x128xf32, #tpu.memory_space<vmem>>, vector<16x128xf32>
    tpu.vector_store %arg11[%c0_28, %c0_29], %44 {strides = array<i32>} : memref<16x128xf32, #tpu.memory_space<vmem>>, vector<16x128xf32>,
    return
  }
  func.func @transform_0(%arg0: i32) -> (i32, i32) {
    %c0_i32 = arith.constant 0 : i32
    %c0_i32_0 = arith.constant 0 : i32
    return %arg0, %c0_i32 : i32, i32
  }
  func.func @transform_1(%arg0: i32) -> (i32, i32) {
    %c0_i32 = arith.constant 0 : i32
    %c0_i32_0 = arith.constant 0 : i32
    %c0_i32_1 = arith.constant 0 : i32
    return %c0_i32, %c0_i32_0 : i32, i32
  }
  func.func @transform_2(%arg0: i32) -> (i32, i32) {
    %c0_i32 = arith.constant 0 : i32
    %c0_i32_0 = arith.constant 0 : i32
    %c0_i32_1 = arith.constant 0 : i32
    return %c0_i32, %c0_i32_0 : i32, i32
  }
  func.func @transform_3(%arg0: i32) -> (i32, i32) {
    %c0_i32 = arith.constant 0 : i32
    %c0_i32_0 = arith.constant 0 : i32
    %c0_i32_1 = arith.constant 0 : i32
    return %c0_i32, %c0_i32_0 : i32, i32
  }
  func.func @transform_4(%arg0: i32) -> (i32, i32) {
    %c0_i32 = arith.constant 0 : i32
    %c0_i32_0 = arith.constant 0 : i32
    %c0_i32_1 = arith.constant 0 : i32
    return %c0_i32, %c0_i32_0 : i32, i32
  }
  func.func @transform_5(%arg0: i32) -> (i32, i32) {
    %c0_i32 = arith.constant 0 : i32
    %c0_i32_0 = arith.constant 0 : i32
    %c0_i32_1 = arith.constant 0 : i32
    return %c0_i32, %c0_i32_0 : i32, i32
  }
  func.func @transform_6(%arg0: i32) -> (i32, i32) {
    %c0_i32 = arith.constant 0 : i32
    %c0_i32_0 = arith.constant 0 : i32
    %c0_i32_1 = arith.constant 0 : i32
    return %c0_i32, %c0_i32_0 : i32, i32
  }
  func.func @transform_7(%arg0: i32) -> (i32, i32) {
    %c0_i32 = arith.constant 0 : i32
    %c0_i32_0 = arith.constant 0 : i32
    %c0_i32_1 = arith.constant 0 : i32
    return %c0_i32, %c0_i32_0 : i32, i32
  }
  func.func @transform_8(%arg0: i32) -> (i32, i32) {
    %c0_i32 = arith.constant 0 : i32
    %c0_i32_0 = arith.constant 0 : i32
    %c0_i32_1 = arith.constant 0 : i32
    return %c0_i32, %c0_i32_0 : i32, i32
  }
  func.func @transform_9(%arg0: i32) -> (i32, i32) {
    %c0_i32 = arith.constant 0 : i32
    %c0_i32_0 = arith.constant 0 : i32
    return %arg0, %c0_i32 : i32, i32
  }
  func.func @transform_10(%arg0: i32) -> (i32, i32) {
    %c0_i32 = arith.constant 0 : i32
    %c0_i32_0 = arith.constant 0 : i32
    return %arg0, %c0_i32 : i32, i32
  }
}

</mosaic_0001>

<llo_original>
// kernel: tpu_custom_call.1
$region0: #{tpu_custom_call.1}
  #allocation0 [shape = 'u32[]', space=smem, size = 0x4, offset = 0x4, fixed_abs, tag = 'smem constant byte address 0x4 - core index']
  #allocation1 [shape = 'u32[72,128]{1,0:T(1,128)}', space=vmem, size = 0x9000, scoped, tag = 'internal scratch']
  %s0 = inlined_call_operand.hbm [shape: bf16[16,32], index: 0, kind: input, shape index: {}]
  %s1 = inlined_call_operand.hbm [shape: bf16[32,32], index: 1, kind: input, shape index: {}]
  %s2 = inlined_call_operand.vmem [shape: f32[1,32], index: 2, kind: input, shape index: {}]
  %s3 = inlined_call_operand.hbm [shape: bf16[32,32], index: 3, kind: input, shape index: {}]
  %s4 = inlined_call_operand.vmem [shape: f32[1,32], index: 4, kind: input, shape index: {}]
  %s5 = inlined_call_operand.hbm [shape: bf16[32,32], index: 5, kind: input, shape index: {}]
  %s6 = inlined_call_operand.vmem [shape: f32[1,32], index: 6, kind: input, shape index: {}]
  %s7 = inlined_call_operand.hbm [shape: bf16[32,128], index: 7, kind: input, shape index: {}]
  %s8 = inlined_call_operand.vmem [shape: f32[1,128], index: 8, kind: input, shape index: {}]
  %s9 = inlined_call_operand.hbm [shape: f32[16,128], index: 9, kind: output, shape index: {0}]
  %s10 = inlined_call_operand.hbm [shape: f32[16,128], index: 10, kind: output, shape index: {1}]
  %11 = xla_tuple %s9, %s10
  %s12 = sld [smem:[#allocation0]]
  $region74: #{tpu_custom_call.1} parent=0
    _
  %s14 = ssub.s32 1, %s12
  %s15 = scalar_select 0, %s14, %s12
  $region1: #{tpu_custom_call.1} parent=0
    #allocation2 [shape = 'u8[4096]{0}', space=vmem, size = 0x1000, scoped, tag = 'input window, operand 0, single buffered']
    #allocation3 [shape = 's32[1]{0}', space=sflag, size = 0x4, scoped, tag = 'scoped memory for tpu_custom_call.1']
    #allocation4 [shape = 's32[1]{0}', space=sflag, size = 0x4, scoped, tag = 'scoped memory for tpu_custom_call.1']
    #allocation5 [shape = 'u8[8192]{0}', space=vmem, size = 0x2000, scoped, tag = 'input window, operand 1, single buffered']
    #allocation6 [shape = 's32[1]{0}', space=sflag, size = 0x4, scoped, tag = 'scoped memory for tpu_custom_call.1']
    #allocation7 [shape = 'u8[8192]{0}', space=vmem, size = 0x2000, scoped, tag = 'input window, operand 3, single buffered']
    #allocation8 [shape = 'u8[8192]{0}', space=vmem, size = 0x2000, scoped, tag = 'input window, operand 5, single buffered']
    #allocation9 [shape = 's32[1]{0}', space=sflag, size = 0x4, scoped, tag = 'scoped memory for tpu_custom_call.1']
    #allocation10 [shape = 'u8[8192]{0}', space=vmem, size = 0x2000, scoped, tag = 'input window, operand 7, single buffered']
    #allocation11 [shape = 'u8[8192]{0}', space=vmem, size = 0x2000, scoped, tag = 'output window, operand 0, single buffered']
    #allocation12 [shape = 'u8[8192]{0}', space=vmem, size = 0x2000, scoped, tag = 'output window, operand 1, single buffered']
    #allocation13 [shape = 's32[1]{0}', space=sflag, size = 0x4, scoped, tag = 'scoped memory for tpu_custom_call.1']
    %16 = vsyncpa [#allocation3], 0
    %17 = vsyncpa [#allocation6], 0
    %18 = vsyncpa [#allocation9], 0
    %19 = vsyncpa [#allocation4], 0
    %20 = vsyncpa [#allocation13], 0
    // Predicated region
    $region2: #{tpu_custom_call.1} parent=1 // pred_check
      _
    $region3: #{tpu_custom_call.1} parent=1 // pred_check_branch
      %22 = sbr.rel (0) target = $region5
    $region4: #{tpu_custom_call.1} parent=1 // pred_region
      %24 = vsyncadd [#allocation3], 0
      %s25 = sshll.u32 %s0, 4
      %s26 = int_to_ptr.hbm [resolvable:$true] %s25
      %s27 = sshll.u32 [#allocation2], 4
      %s28 = int_to_ptr.vmem [resolvable:$true] %s27
      %33 = dma.hbm_to_vmem [thread:$0]  %s26, 128, %s28, [#allocation3], 64, 64, 4
    $region5: #{tpu_custom_call.1} parent=1 // pred_fallthru
      _
    // Predicated region
    $region6: #{tpu_custom_call.1} parent=1 // pred_check
      _
    $region7: #{tpu_custom_call.1} parent=1 // pred_check_branch
      %35 = sbr.rel (0) target = $region9
    $region8: #{tpu_custom_call.1} parent=1 // pred_region
      %37 = vsyncadd [#allocation6], 0
      %s38 = sshll.u32 %s1, 4
      %s39 = int_to_ptr.hbm [resolvable:$true] %s38
      %s40 = sshll.u32 [#allocation5], 4
      %s41 = int_to_ptr.vmem [resolvable:$true] %s40
      %46 = dma.hbm_to_vmem [thread:$0]  %s39, 256, %s41, [#allocation6], 64, 64, 4
    $region9: #{tpu_custom_call.1} parent=1 // pred_fallthru
      _
    // Predicated region
    $region10: #{tpu_custom_call.1} parent=1 // pred_check
      _
    $region11: #{tpu_custom_call.1} parent=1 // pred_check_branch
      %48 = sbr.rel (0) target = $region13
    $region12: #{tpu_custom_call.1} parent=1 // pred_region
      _
    $region13: #{tpu_custom_call.1} parent=1 // pred_fallthru
      _
    // Predicated region
    $region14: #{tpu_custom_call.1} parent=1 // pred_check
      _
    $region15: #{tpu_custom_call.1} parent=1 // pred_check_branch
      %50 = sbr.rel (0) target = $region17
    $region16: #{tpu_custom_call.1} parent=1 // pred_region
      %52 = vsyncadd [#allocation6], 0
      %s53 = sshll.u32 %s3, 4
      %s54 = int_to_ptr.hbm [resolvable:$true] %s53
      %s55 = sshll.u32 [#allocation7], 4
      %s56 = int_to_ptr.vmem [resolvable:$true] %s55
      %61 = dma.hbm_to_vmem [thread:$0]  %s54, 256, %s56, [#allocation6], 64, 64, 4
    $region17: #{tpu_custom_call.1} parent=1 // pred_fallthru
      _
    // Predicated region
    $region18: #{tpu_custom_call.1} parent=1 // pred_check
      _
    $region19: #{tpu_custom_call.1} parent=1 // pred_check_branch
      %63 = sbr.rel (0) target = $region21
    $region20: #{tpu_custom_call.1} parent=1 // pred_region
      _
    $region21: #{tpu_custom_call.1} parent=1 // pred_fallthru
      _
    // Predicated region
    $region22: #{tpu_custom_call.1} parent=1 // pred_check
      _
    $region23: #{tpu_custom_call.1} parent=1 // pred_check_branch
      %65 = sbr.rel (0) target = $region25
    $region24: #{tpu_custom_call.1} parent=1 // pred_region
      %67 = vsyncadd [#allocation9], 0
      %s68 = sshll.u32 %s5, 4
      %s69 = int_to_ptr.hbm [resolvable:$true] %s68
      %s70 = sshll.u32 [#allocation8], 4
      %s71 = int_to_ptr.vmem [resolvable:$true] %s70
      %76 = dma.hbm_to_vmem [thread:$0]  %s69, 256, %s71, [#allocation9], 64, 64, 4
    $region25: #{tpu_custom_call.1} parent=1 // pred_fallthru
      _
    // Predicated region
    $region26: #{tpu_custom_call.1} parent=1 // pred_check
      _
    $region27: #{tpu_custom_call.1} parent=1 // pred_check_branch
      %78 = sbr.rel (0) target = $region29
    $region28: #{tpu_custom_call.1} parent=1 // pred_region
      _
    $region29: #{tpu_custom_call.1} parent=1 // pred_fallthru
      _
    // Predicated region
    $region30: #{tpu_custom_call.1} parent=1 // pred_check
      _
    $region31: #{tpu_custom_call.1} parent=1 // pred_check_branch
      %80 = sbr.rel (0) target = $region33
    $region32: #{tpu_custom_call.1} parent=1 // pred_region
      %82 = vsyncadd [#allocation9], 0
      %s83 = sshll.u32 %s7, 4
      %s84 = int_to_ptr.hbm [resolvable:$true] %s83
      %s85 = sshll.u32 [#allocation10], 4
      %s86 = int_to_ptr.vmem [resolvable:$true] %s85
      %91 = dma.hbm_to_vmem [thread:$0]  %s84, 256, %s86, [#allocation9], 64, 64, 4
    $region33: #{tpu_custom_call.1} parent=1 // pred_fallthru
      _
    // Predicated region
    $region34: #{tpu_custom_call.1} parent=1 // pred_check
      _
    $region35: #{tpu_custom_call.1} parent=1 // pred_check_branch
      %93 = sbr.rel (0) target = $region37
    $region36: #{tpu_custom_call.1} parent=1 // pred_region
      _
    $region37: #{tpu_custom_call.1} parent=1 // pred_fallthru
      _
    // Predicated region
    $region38: #{tpu_custom_call.1} parent=1 // pred_check
      _
    $region39: #{tpu_custom_call.1} parent=1 // pred_check_branch
      %95 = sbr.rel (0) target = $region41
    $region40: #{tpu_custom_call.1} parent=1 // pred_region
      %97 = dma.done [#allocation3], 128
    $region41: #{tpu_custom_call.1} parent=1 // pred_fallthru
      _
    // Predicated region
    $region42: #{tpu_custom_call.1} parent=1 // pred_check
      _
    $region43: #{tpu_custom_call.1} parent=1 // pred_check_branch
      %99 = sbr.rel (0) target = $region45
    $region44: #{tpu_custom_call.1} parent=1 // pred_region
      %101 = dma.done [#allocation6], 256
    $region45: #{tpu_custom_call.1} parent=1 // pred_fallthru
      _
    // Predicated region
    $region46: #{tpu_custom_call.1} parent=1 // pred_check
      _
    $region47: #{tpu_custom_call.1} parent=1 // pred_check_branch
      %103 = sbr.rel (0) target = $region49
    $region48: #{tpu_custom_call.1} parent=1 // pred_region
      %105 = dma.done [#allocation6], 256
    $region49: #{tpu_custom_call.1} parent=1 // pred_fallthru
      _
    // Predicated region
    $region50: #{tpu_custom_call.1} parent=1 // pred_check
      _
    $region51: #{tpu_custom_call.1} parent=1 // pred_check_branch
      %107 = sbr.rel (0) target = $region53
    $region52: #{tpu_custom_call.1} parent=1 // pred_region
      %109 = dma.done [#allocation9], 256
    $region53: #{tpu_custom_call.1} parent=1 // pred_fallthru
      _
    // Predicated region
    $region54: #{tpu_custom_call.1} parent=1 // pred_check
      _
    $region55: #{tpu_custom_call.1} parent=1 // pred_check_branch
      %111 = sbr.rel (0) target = $region57
    $region56: #{tpu_custom_call.1} parent=1 // pred_region
      %113 = dma.done [#allocation9], 256
    $region57: #{tpu_custom_call.1} parent=1 // pred_fallthru
      _
    %v115 = vld [vmem:[#allocation2] sm:$0xf]
    %v116 = vld [vmem:[#allocation2 + $0x4] sm:$0xf]
    %v117 = vld [vmem:[#allocation5] sm:$0xf]
    %v118 = vld [vmem:[#allocation5 + $0x4] sm:$0xf]
    %v119 = vld [vmem:[#allocation5 + $0x8] sm:$0xf]
    %v120 = vld [vmem:[#allocation5 + $0xc] sm:$0xf]
    %v121 = vld [vmem:[%s2] sm:$0x1]
    %v123 = vperm.slane %v121, 0
    %v127 = vunpack.c.l.b16 %v115
    %v128 = vunpack.c.l.b16 %v116
    %v129 = vpack.c.b16 %v128, %v127
    %v134 = vunpack.c.l.b16 %v117
    %v135 = vunpack.c.l.b16 %v118
    %v136 = vunpack.c.l.b16 %v119
    %v137 = vunpack.c.l.b16 %v120
    %v138 = vpack.c.b16 %v135, %v134
    %v139 = vpack.c.b16 %v137, %v136
    %vm142 = vcmask 261120
    %v144 = vsel %vm142, %v129, 0
    %146 = vmatpush.bf16.msra.mxu0 0
    %147 = vmatpush.bf16.msra.mxu0 0
    %148 = vmatpush.bf16.msra.mxu0 0
    %149 = vmatpush.bf16.msra.mxu0 0
    %150 = vmatpush.bf16.msra.mxu0 0
    %151 = vmatpush.bf16.msra.mxu0 0
    %152 = vmatpush.bf16.msra.mxu0 %v139
    %153 = vmatpush.bf16.msra.mxu0 %v138
    %154 = vmatmul.bf16.gmra.mxu0 %v144
    %v155 = vpop.f32.mrf.mxu0
    %v156 = vadd.f32 %v123, %v155
    %v157 = vpop.f32.mrf.mxu0
    %v158 = vadd.f32 %v123, %v157
    %159 = vdwg.mxu0
    %v160 = vmax.f32 %v156, 0.0
    %v161 = vmax.f32 %v158, 0.0
    %v162 = vpack.c.bf16 %v161, %v160
    %v163 = vld [vmem:[#allocation7] sm:$0xf]
    %v164 = vld [vmem:[#allocation7 + $0x4] sm:$0xf]
    %v165 = vld [vmem:[#allocation7 + $0x8] sm:$0xf]
    %v166 = vld [vmem:[#allocation7 + $0xc] sm:$0xf]
    %v167 = vld [vmem:[%s4] sm:$0x1]
    %v169 = vperm.slane %v167, 0
    %v175 = vunpack.c.l.b16 %v163
    %v176 = vunpack.c.l.b16 %v164
    %v177 = vunpack.c.l.b16 %v165
    %v178 = vunpack.c.l.b16 %v166
    %v179 = vpack.c.b16 %v176, %v175
    %v180 = vpack.c.b16 %v178, %v177
    %v184 = vsel %vm142, %v162, 0
    %186 = vmatpush.bf16.msra.mxu0 0
    %187 = vmatpush.bf16.msra.mxu0 0
    %188 = vmatpush.bf16.msra.mxu0 0
    %189 = vmatpush.bf16.msra.mxu0 0
    %190 = vmatpush.bf16.msra.mxu0 0
    %191 = vmatpush.bf16.msra.mxu0 0
    %192 = vmatpush.bf16.msra.mxu0 %v180
    %193 = vmatpush.bf16.msra.mxu0 %v179
    %194 = vmatmul.bf16.gmra.mxu0 %v184
    %v195 = vpop.f32.mrf.mxu0
    %v196 = vadd.f32 %v169, %v195
    %v197 = vpop.f32.mrf.mxu0
    %v198 = vadd.f32 %v169, %v197
    %199 = vdwg.mxu0
    %v200 = vmax.f32 %v196, 0.0
    %v201 = vmax.f32 %v198, 0.0
    %v202 = vpack.c.bf16 %v201, %v200
    %v203 = vld [vmem:[#allocation8] sm:$0xf]
    %v204 = vld [vmem:[#allocation8 + $0x4] sm:$0xf]
    %v205 = vld [vmem:[#allocation8 + $0x8] sm:$0xf]
    %v206 = vld [vmem:[#allocation8 + $0xc] sm:$0xf]
    %v207 = vld [vmem:[%s6] sm:$0x1]
    %v209 = vperm.slane %v207, 0
    %v215 = vunpack.c.l.b16 %v203
    %v216 = vunpack.c.l.b16 %v204
    %v217 = vunpack.c.l.b16 %v205
    %v218 = vunpack.c.l.b16 %v206
    %v219 = vpack.c.b16 %v216, %v215
    %v220 = vpack.c.b16 %v218, %v217
    %v224 = vsel %vm142, %v202, 0
    %226 = vmatpush.bf16.msra.mxu0 0
    %227 = vmatpush.bf16.msra.mxu0 0
    %228 = vmatpush.bf16.msra.mxu0 0
    %229 = vmatpush.bf16.msra.mxu0 0
    %230 = vmatpush.bf16.msra.mxu0 0
    %231 = vmatpush.bf16.msra.mxu0 0
    %232 = vmatpush.bf16.msra.mxu0 %v220
    %233 = vmatpush.bf16.msra.mxu0 %v219
    %234 = vmatmul.bf16.gmra.mxu0 %v224
    %v235 = vpop.f32.mrf.mxu0
    %v236 = vadd.f32 %v209, %v235
    %v237 = vpop.f32.mrf.mxu0
    %v238 = vadd.f32 %v209, %v237
    %239 = vdwg.mxu0
    %v240 = vpack.c.bf16 %v238, %v236
    %v241 = vld [vmem:[#allocation10] sm:$0xf]
    %v242 = vld [vmem:[#allocation10 + $0x4] sm:$0xf]
    %v243 = vld [vmem:[#allocation10 + $0x8] sm:$0xf]
    %v244 = vld [vmem:[#allocation10 + $0xc] sm:$0xf]
    %v245 = vld [vmem:[%s8] sm:$0x1]
    %v247 = vperm.slane %v245, 0
    %v253 = vunpack.c.l.b16 %v241
    %v254 = vunpack.c.l.b16 %v242
    %v255 = vunpack.c.l.b16 %v243
    %v256 = vunpack.c.l.b16 %v244
    %v257 = vpack.c.b16 %v254, %v253
    %v258 = vpack.c.b16 %v256, %v255
    %v262 = vsel %vm142, %v240, 0
    %264 = vmatpush.bf16.msra.mxu0 0
    %265 = vmatpush.bf16.msra.mxu0 0
    %266 = vmatpush.bf16.msra.mxu0 0
    %267 = vmatpush.bf16.msra.mxu0 0
    %268 = vmatpush.bf16.msra.mxu0 0
    %269 = vmatpush.bf16.msra.mxu0 0
    %270 = vmatpush.bf16.msra.mxu0 %v258
    %271 = vmatpush.bf16.msra.mxu0 %v257
    %272 = vmatmul.bf16.gmra.mxu0 %v262
    %v273 = vpop.f32.mrf.mxu0
    %v274 = vadd.f32 %v247, %v273
    %v275 = vpop.f32.mrf.mxu0
    %v276 = vadd.f32 %v247, %v275
    %277 = vdwg.mxu0
    %278 = vst [vmem:[#allocation11] sm:$0xff] %v274
    %279 = vst [vmem:[#allocation11 + $0x8] sm:$0xff] %v276
    %v280 = vlaneseq
    %v281 = vand.u32 %v280, 127
    %vm282 = vcmp.lt.s32.totalorder %v281, 8
    %v283 = vsel %vm282, %v274, -inf
    %v284 = vsel %vm282, %v276, -inf
    %285 = vmax.xlane.f32.xlu0 %v283
    %v286 = vpop.xlane.xlu0 %285
    %287 = vmax.xlane.f32.xlu0 %v284
    %v288 = vpop.xlane.xlu0 %287
    %v289 = vsub.f32 %v274, %v286
    %v290 = vsub.f32 %v276, %v288
    %v291 = vmul.f32 %v289, 1.442695
    %v292 = vpow.pop %v291
    %v293 = vmul.f32 %v290, 1.442695
    %v294 = vpow.pop %v293
    %v295 = vsel %vm282, %v292, 0.0
    %v296 = vsel %vm282, %v294, 0.0
    %297 = vadd.xlane.f32.xlu0 %v295
    %v298 = vpop.xlane.xlu0 %297
    %299 = vadd.xlane.f32.xlu0 %v296
    %v300 = vpop.xlane.xlu0 %299
    %v301 = vrcp.pop %v298
    %v302 = vmul.f32 %v298, %v301
    %v303 = vsub.f32 1.0, %v302
    %v304 = vmul.f32 %v301, %v303
    %v305 = vadd.f32 %v301, %v304
    %vm306 = vweird.f32 %v298
    %vm307 = vweird.f32 %v301
    %vm308 = vmor %vm306, %vm307
    %v309 = vsel %vm308, %v301, %v305
    %v310 = vand.u32 2147483647, %v298
    %vm311 = vcmp.eq.f32.partialorder %v310, 8.507059e+37
    %v312 = vand.u32 %v298, 2147483648
    %v313 = vor.u32 1.1754944e-38, %v312
    %v314 = vsel %vm311, %v313, %v309
    %v315 = vmul.f32 %v295, %v314
    %v316 = vrcp.pop %v300
    %v317 = vmul.f32 %v300, %v316
    %v318 = vsub.f32 1.0, %v317
    %v319 = vmul.f32 %v316, %v318
    %v320 = vadd.f32 %v316, %v319
    %vm321 = vweird.f32 %v300
    %vm322 = vweird.f32 %v316
    %vm323 = vmor %vm321, %vm322
    %v324 = vsel %vm323, %v316, %v320
    %v325 = vand.u32 2147483647, %v300
    %vm326 = vcmp.eq.f32.partialorder %v325, 8.507059e+37
    %v327 = vand.u32 %v300, 2147483648
    %v328 = vor.u32 1.1754944e-38, %v327
    %v329 = vsel %vm326, %v328, %v324
    %v330 = vmul.f32 %v296, %v329
    %331 = vst [vmem:[#allocation12] sm:$0xff] %v315
    %332 = vst [vmem:[#allocation12 + $0x8] sm:$0xff] %v330
    // Predicated region
    $region58: #{tpu_custom_call.1} parent=1 // pred_check
      _
    $region59: #{tpu_custom_call.1} parent=1 // pred_check_branch
      %334 = sbr.rel (0) target = $region61
    $region60: #{tpu_custom_call.1} parent=1 // pred_region
      %336 = vsyncadd [#allocation4], 0
      %s337 = sshll.u32 [#allocation11], 4
      %s338 = int_to_ptr.vmem [resolvable:$true] %s337
      %s339 = sshll.u32 %s9, 4
      %s340 = int_to_ptr.hbm [resolvable:$true] %s339
      %345 = dma.vmem_to_hbm [thread:$0]  %s338, 256, %s340, [#allocation4], 128, 128, 8
    $region61: #{tpu_custom_call.1} parent=1 // pred_fallthru
      _
    // Predicated region
    $region62: #{tpu_custom_call.1} parent=1 // pred_check
      _
    $region63: #{tpu_custom_call.1} parent=1 // pred_check_branch
      %347 = sbr.rel (0) target = $region65
    $region64: #{tpu_custom_call.1} parent=1 // pred_region
      %349 = vsyncadd [#allocation13], 0
      %s350 = sshll.u32 [#allocation12], 4
      %s351 = int_to_ptr.vmem [resolvable:$true] %s350
      %s352 = sshll.u32 %s10, 4
      %s353 = int_to_ptr.hbm [resolvable:$true] %s352
      %358 = dma.vmem_to_hbm [thread:$0]  %s351, 256, %s353, [#allocation13], 128, 128, 8
    $region65: #{tpu_custom_call.1} parent=1 // pred_fallthru
      _
    // Predicated region
    $region66: #{tpu_custom_call.1} parent=1 // pred_check
      _
    $region67: #{tpu_custom_call.1} parent=1 // pred_check_branch
      %360 = sbr.rel (0) target = $region69
    $region68: #{tpu_custom_call.1} parent=1 // pred_region
      %362 = dma.done [#allocation4], 256
    $region69: #{tpu_custom_call.1} parent=1 // pred_fallthru
      _
    // Predicated region
    $region70: #{tpu_custom_call.1} parent=1 // pred_check
      _
    $region71: #{tpu_custom_call.1} parent=1 // pred_check_branch
      %364 = sbr.rel (0) target = $region73
    $region72: #{tpu_custom_call.1} parent=1 // pred_region
      %366 = dma.done [#allocation13], 256
    $region73: #{tpu_custom_call.1} parent=1 // pred_fallthru
      _
    %367 = vsyncpa [#allocation3], 1
    %368 = vsyncpa [#allocation6], 1
    %369 = vsyncpa [#allocation9], 1
    %370 = vsyncpa [#allocation4], 1
    %371 = vsyncpa [#allocation13], 1

</llo_original>
